<compile_context>
chip_gen: v7x
topology: tpu7x:2x2x1
jax: 0.10.0
libtpu: 0.0.40
codegen_flags: <defaults>
</compile_context>

<pallas_src>
import jax
import jax.numpy as jnp
from jax.experimental import pallas as pl
from jax.experimental.pallas import tpu as pltpu

LANE = 128


def _round_up(x, m):
    return ((x + m - 1) // m) * m


# --------------------------------- kernel ------------------------------------

def mlp_fused_kernel(x_ref,
                     w1_ref, b1_ref,
                     w2_ref, b2_ref,
                     w3_ref, b3_ref,
                     wh_ref, bh_ref,
                     out_ref):
    """3x (Linear + ReLU) + fused (action|value) head on one batch tile.

    All operands are lane-dense: hidden dim and head dim are zero-padded to a
    multiple of 128 at parameter-prep time, so every bias-add/ReLU runs on full
    vregs and every matmul feeds the MXU 128-wide tiles.
    """
    op_dtype = w1_ref.dtype  # f32 or bf16 operands; accumulation is always f32.

    h = jnp.dot(x_ref[...], w1_ref[...],
                preferred_element_type=jnp.float32) + b1_ref[...]
    h = jnp.maximum(h, 0.0)

    h = jnp.dot(h.astype(op_dtype), w2_ref[...],
                preferred_element_type=jnp.float32) + b2_ref[...]
    h = jnp.maximum(h, 0.0)

    h = jnp.dot(h.astype(op_dtype), w3_ref[...],
                preferred_element_type=jnp.float32) + b3_ref[...]
    h = jnp.maximum(h, 0.0)

    out = jnp.dot(h.astype(op_dtype), wh_ref[...],
                  preferred_element_type=jnp.float32) + bh_ref[...]
    out_ref[...] = out.astype(out_ref.dtype)


# --------------------------- one-time parameter prep -------------------------

def prepare_params(params, *, use_bf16=False):
    """Fuse heads, pad hidden/head dims to lane-dense widths, cast operands.

    Run ONCE per parameter set (not per forward call): the concat/pad/cast ops
    here were previously executed as separate XLA ops on every forward.
    """
    w1, b1, w2, b2, w3, b3, wa, ba, wv, bv = params
    input_dim, hidden_dim = w1.shape
    action_dim = wa.shape[1]
    head_dim = action_dim + 1                         # logits + value fused
    hp = _round_up(max(hidden_dim, LANE), LANE)       # lane-dense hidden
    out_pad = _round_up(max(head_dim, LANE), LANE)    # lane-dense head output

    op_dtype = jnp.bfloat16 if use_bf16 else jnp.float32

    def pad2(w, rows, cols):
        return jnp.pad(w, ((0, rows - w.shape[0]), (0, cols - w.shape[1])))

    wh = jnp.concatenate([wa, wv], axis=1)                       # (H, A+1)
    bh = jnp.concatenate([ba.reshape(1, -1), bv.reshape(1, -1)], axis=1)

    return dict(
        w1=pad2(w1, input_dim, hp).astype(op_dtype),
        b1=pad2(b1.reshape(1, -1), 1, hp).astype(jnp.float32),
        w2=pad2(w2, hp, hp).astype(op_dtype),
        b2=pad2(b2.reshape(1, -1), 1, hp).astype(jnp.float32),
        w3=pad2(w3, hp, hp).astype(op_dtype),
        b3=pad2(b3.reshape(1, -1), 1, hp).astype(jnp.float32),
        wh=pad2(wh, hp, out_pad).astype(op_dtype),
        bh=pad2(bh, 1, out_pad).astype(jnp.float32),
        input_dim=input_dim,
        hidden_pad=hp,
        out_pad=out_pad,
        action_dim=action_dim,
        head_dim=head_dim,
        use_bf16=use_bf16,
    )


# ---------------------------------- forward ----------------------------------

def mlp_baseline_forward(state, prepped, *, batch_tile=1024, core_parallel=False):
    """state: (B, H, W) -> {'action_logits': (B, A), 'value': (B, 1)}.

    `prepped` comes from prepare_params (pre-fused / pre-padded / pre-cast).
    batch_tile: rows per grid step; sweep 512-2048 (larger = fewer grid steps).
    core_parallel: set True on v7x to shard batch tiles across both TensorCores
    (pltpu.CORE_PARALLEL); leave False on single-TC v5e/v6e.
    """
    b = state.shape[0]
    input_dim = prepped["input_dim"]
    hp = prepped["hidden_pad"]
    out_pad = prepped["out_pad"]
    use_bf16 = prepped["use_bf16"]
    op_dtype = jnp.bfloat16 if use_bf16 else jnp.float32
    out_dtype = jnp.bfloat16 if use_bf16 else jnp.float32

    # Single fused reshape + cast straight from the state dtype (no f32 detour,
    # no explicit batch pad — the ragged last tile is masked by Pallas and the
    # garbage rows never feed a cross-row reduction).
    x = state.reshape(b, -1).astype(op_dtype)
    assert x.shape[1] == input_dim

    # Batch tiling: multiple of sublane packing; grid kept as small as possible.
    sub = 16 if use_bf16 else 8
    tb = max(sub, min(batch_tile, _round_up(b, sub)))
    tb = _round_up(tb, sub)
    grid = (pl.cdiv(b, tb),)

    rep = lambda i: (0, 0)  # weights / biases replicated across batch tiles

    dims = (pltpu.CORE_PARALLEL,) if core_parallel else ("parallel",)

    # Only raise the scoped-VMEM limit when a very large batch_tile needs it
    # (never triggers at the default tile; keeps headroom on v7x's 64 MiB).
    x_bytes = jnp.dtype(op_dtype).itemsize
    o_bytes = jnp.dtype(out_dtype).itemsize
    w_bytes = sum(int(prepped[k].size) * prepped[k].dtype.itemsize
                  for k in ("w1", "b1", "w2", "b2", "w3", "b3", "wh", "bh"))
    est_vmem = 2 * tb * (input_dim * x_bytes + out_pad * o_bytes) + 2 * w_bytes
    compiler_kwargs = dict(dimension_semantics=dims)
    if est_vmem > 24 * 1024 * 1024:
        compiler_kwargs["vmem_limit_bytes"] = min(int(est_vmem * 2), 56 * 1024 * 1024)

    out = pl.pallas_call(
        mlp_fused_kernel,
        out_shape=jax.ShapeDtypeStruct((b, out_pad), out_dtype),
        grid_spec=pltpu.PrefetchScalarGridSpec(
            num_scalar_prefetch=0,
            grid=grid,
            in_specs=[
                pl.BlockSpec((tb, input_dim), lambda i: (i, 0)),   # x
                pl.BlockSpec((input_dim, hp), rep),                # w1
                pl.BlockSpec((1, hp), rep),                        # b1
                pl.BlockSpec((hp, hp), rep),                       # w2
                pl.BlockSpec((1, hp), rep),                        # b2
                pl.BlockSpec((hp, hp), rep),                       # w3
                pl.BlockSpec((1, hp), rep),                        # b3
                pl.BlockSpec((hp, out_pad), rep),                  # fused head W
                pl.BlockSpec((1, out_pad), rep),                   # fused head b
            ],
            out_specs=pl.BlockSpec((tb, out_pad), lambda i: (i, 0)),
        ),
        compiler_params=pltpu.CompilerParams(**compiler_kwargs),
    )(x, prepped["w1"], prepped["b1"], prepped["w2"], prepped["b2"],
      prepped["w3"], prepped["b3"], prepped["wh"], prepped["bh"])

    action_dim = prepped["action_dim"]
    head_dim = prepped["head_dim"]
    action_logits = out[:, :action_dim]
    value = out[:, action_dim:head_dim]
    return {"action_logits": action_logits, "value": value}


# ----------------------------- init / reference ------------------------------

def xavier_uniform(key, fan_in, fan_out):
    # Matches torch.nn.init.xavier_uniform_ (gain=1); stored as (in, out).
    limit = jnp.sqrt(6.0 / (fan_in + fan_out))
    return jax.random.uniform(key, (fan_in, fan_out), jnp.float32, -limit, limit)


def init_params(key, input_dim, hidden_dim, action_dim):
    ks = jax.random.split(key, 5)
    w1 = xavier_uniform(ks[0], input_dim, hidden_dim)
    w2 = xavier_uniform(ks[1], hidden_dim, hidden_dim)
    w3 = xavier_uniform(ks[2], hidden_dim, hidden_dim)
    wa = xavier_uniform(ks[3], hidden_dim, action_dim)
    wv = xavier_uniform(ks[4], hidden_dim, 1)
    b1 = jnp.zeros((1, hidden_dim), jnp.float32)
    b2 = jnp.zeros((1, hidden_dim), jnp.float32)
    b3 = jnp.zeros((1, hidden_dim), jnp.float32)
    ba = jnp.zeros((1, action_dim), jnp.float32)
    bv = jnp.zeros((1, 1), jnp.float32)
    return (w1, b1, w2, b2, w3, b3, wa, ba, wv, bv)


def reference_forward(state, params):
    b = state.shape[0]
    x = state.reshape(b, -1).astype(jnp.float32)
    w1, b1, w2, b2, w3, b3, wa, ba, wv, bv = params
    h = jnp.maximum(x @ w1 + b1, 0.0)
    h = jnp.maximum(h @ w2 + b2, 0.0)
    h = jnp.maximum(h @ w3 + b3, 0.0)
    return h @ wa + ba, h @ wv + bv


# ------------------------------------ main ------------------------------------

if __name__ == "__main__":
    # Small shapes consistent with the module:
    #   grid_size=(8, 8) -> input_dim=64, hidden_dim=32, action_dim=6, batch=2
    grid_size = (8, 8)
    hidden_dim = 32
    action_dim = 6
    batch = 2
    input_dim = grid_size[0] * grid_size[1]

    key = jax.random.PRNGKey(0)
    k_state, k_params, k_big = jax.random.split(key, 3)

    state = jax.random.normal(k_state, (batch, grid_size[0], grid_size[1]),
                              jnp.float32)
    params = init_params(k_params, input_dim, hidden_dim, action_dim)

    # One-time parameter prep (fusion / padding / casts hoisted out of forward).
    prepped_f32 = prepare_params(params, use_bf16=False)
    prepped_f32 = jax.tree_util.tree_map(
        lambda a: jax.block_until_ready(a) if isinstance(a, jax.Array) else a,
        prepped_f32)

    # --- small batch, f32 path (exact module semantics) ----------------------
    out = mlp_baseline_forward(state, prepped_f32)
    jax.block_until_ready(out)
    ref_logits, ref_value = reference_forward(state, params)
    assert out["action_logits"].shape == (batch, action_dim)
    assert out["value"].shape == (batch, 1)
    assert jnp.allclose(out["action_logits"], ref_logits, atol=1e-4)
    assert jnp.allclose(out["value"], ref_value, atol=1e-4)

    # --- larger batch, single large batch tile (fewest grid steps) -----------
    big_batch = 256
    big_state = jax.random.normal(k_big, (big_batch, grid_size[0], grid_size[1]),
                                  jnp.float32)
    out_big = mlp_baseline_forward(big_state, prepped_f32, batch_tile=1024)
    jax.block_until_ready(out_big)
    ref_logits_b, ref_value_b = reference_forward(big_state, params)
    assert out_big["action_logits"].shape == (big_batch, action_dim)
    assert out_big["value"].shape == (big_batch, 1)
    assert jnp.allclose(out_big["action_logits"], ref_logits_b, atol=1e-4)
    assert jnp.allclose(out_big["value"], ref_value_b, atol=1e-4)

    # --- ragged batch (not a multiple of the tile): partial last block -------
    ragged = 250
    ragged_state = big_state[:ragged]
    out_rag = mlp_baseline_forward(ragged_state, prepped_f32, batch_tile=128)
    jax.block_until_ready(out_rag)
    assert out_rag["action_logits"].shape == (ragged, action_dim)
    assert jnp.allclose(out_rag["action_logits"], ref_logits_b[:ragged], atol=1e-4)
    assert jnp.allclose(out_rag["value"], ref_value_b[:ragged], atol=1e-4)

    # --- bf16-operand / f32-accumulate path (halves HBM bytes for x/W/out) ---
    prepped_bf16 = prepare_params(params, use_bf16=True)
    out_bf16 = mlp_baseline_forward(big_state, prepped_bf16, batch_tile=1024)
    jax.block_until_ready(out_bf16)
    assert jnp.allclose(out_bf16["action_logits"].astype(jnp.float32),
                        ref_logits_b, atol=2e-1)
    assert jnp.allclose(out_bf16["value"].astype(jnp.float32),
                        ref_value_b, atol=2e-1)

    # TODO(synk): get_action_distribution (Categorical sampling) has no in-kernel
    # equivalent; apply jax.nn.softmax / categorical sampling to action_logits.

    print("KERNEL_OK")
</pallas_src>

<mosaic_0001>
module attributes {stable_mosaic.version = 11 : i64} {
  func.func @mlp_fused_kernel(%arg0: i32, %arg1: memref<8x64xf32, #tpu.memory_space<vmem>>, %arg2: memref<64x128xf32, #tpu.memory_space<vmem>>, %arg3: memref<1x128xf32, #tpu.memory_space<vmem>>, %arg4: memref<128x128xf32, #tpu.memory_space<vmem>>, %arg5: memref<1x128xf32, #tpu.memory_space<vmem>>, %arg6: memref<128x128xf32, #tpu.memory_space<vmem>>, %arg7: memref<1x128xf32, #tpu.memory_space<vmem>>, %arg8: memref<128x128xf32, #tpu.memory_space<vmem>>, %arg9: memref<1x128xf32, #tpu.memory_space<vmem>>, %arg10: memref<8x128xf32, #tpu.memory_space<vmem>>) attributes {dimension_semantics = [#tpu.dimension_semantics<parallel>], iteration_bounds = array<i64: 1>, scalar_prefetch = 0 : i64, scratch_operands = 0 : i64, tpu.core_type = #tpu.core_type<tc>, window_params = [{transform_indices = @transform_0, window_bounds = array<i64: 8, 64>}, {pipeline_mode = #tpu.pipeline_mode<synchronous>, transform_indices = @transform_1, window_bounds = array<i64: 64, 128>}, {pipeline_mode = #tpu.pipeline_mode<synchronous>, transform_indices = @transform_2, window_bounds = array<i64: 1, 128>}, {pipeline_mode = #tpu.pipeline_mode<synchronous>, transform_indices = @transform_3, window_bounds = array<i64: 128, 128>}, {pipeline_mode = #tpu.pipeline_mode<synchronous>, transform_indices = @transform_4, window_bounds = array<i64: 1, 128>}, {pipeline_mode = #tpu.pipeline_mode<synchronous>, transform_indices = @transform_5, window_bounds = array<i64: 128, 128>}, {pipeline_mode = #tpu.pipeline_mode<synchronous>, transform_indices = @transform_6, window_bounds = array<i64: 1, 128>}, {pipeline_mode = #tpu.pipeline_mode<synchronous>, transform_indices = @transform_7, window_bounds = array<i64: 128, 128>}, {pipeline_mode = #tpu.pipeline_mode<synchronous>, transform_indices = @transform_8, window_bounds = array<i64: 1, 128>}, {transform_indices = @transform_9, window_bounds = array<i64: 8, 128>}]} {
    %c0 = arith.constant 0 : index
    %c0_0 = arith.constant 0 : index
    %0 = vector.load %arg1[%c0, %c0_0] : memref<8x64xf32, #tpu.memory_space<vmem>>, vector<8x64xf32>
    %c0_1 = arith.constant 0 : index
    %c0_2 = arith.constant 0 : index
    %1 = vector.load %arg2[%c0_1, %c0_2] : memref<64x128xf32, #tpu.memory_space<vmem>>, vector<64x128xf32>
    %cst = arith.constant dense<0.000000e+00> : vector<8x128xf32>
    %2 = tpu.matmul %0, %1, %cst {dimension_numbers = #tpu.dot_dimension_numbers<[1], [0], [0], [1], [0, 0, 1, 1], [], []>} : vector<8x64xf32>, vector<64x128xf32>, vector<8x128xf32> -> vector<8x128xf32>
    %c0_3 = arith.constant 0 : index
    %c0_4 = arith.constant 0 : index
    %3 = vector.load %arg3[%c0_3, %c0_4] : memref<1x128xf32, #tpu.memory_space<vmem>>, vector<1x128xf32>
    %4 = vector.broadcast %3 : vector<1x128xf32> to vector<8x128xf32>
    %5 = arith.addf %2, %4 : vector<8x128xf32>
    %cst_5 = arith.constant 0.000000e+00 : f32
    %6 = vector.broadcast %cst_5 : f32 to vector<8x128xf32>
    %7 = arith.maximumf %5, %6 : vector<8x128xf32>
    %c0_6 = arith.constant 0 : index
    %c0_7 = arith.constant 0 : index
    %8 = vector.load %arg4[%c0_6, %c0_7] : memref<128x128xf32, #tpu.memory_space<vmem>>, vector<128x128xf32>
    %cst_8 = arith.constant dense<0.000000e+00> : vector<8x128xf32>
    %9 = tpu.matmul %7, %8, %cst_8 {dimension_numbers = #tpu.dot_dimension_numbers<[1], [0], [0], [1], [0, 0, 1, 1], [], []>} : vector<8x128xf32>, vector<128x128xf32>, vector<8x128xf32> -> vector<8x128xf32>
    %c0_9 = arith.constant 0 : index
    %c0_10 = arith.constant 0 : index
    %10 = vector.load %arg5[%c0_9, %c0_10] : memref<1x128xf32, #tpu.memory_space<vmem>>, vector<1x128xf32>
    %11 = vector.broadcast %10 : vector<1x128xf32> to vector<8x128xf32>
    %12 = arith.addf %9, %11 : vector<8x128xf32>
    %cst_11 = arith.constant 0.000000e+00 : f32
    %13 = vector.broadcast %cst_11 : f32 to vector<8x128xf32>
    %14 = arith.maximumf %12, %13 : vector<8x128xf32>
    %c0_12 = arith.constant 0 : index
    %c0_13 = arith.constant 0 : index
    %15 = vector.load %arg6[%c0_12, %c0_13] : memref<128x128xf32, #tpu.memory_space<vmem>>, vector<128x128xf32>
    %cst_14 = arith.constant dense<0.000000e+00> : vector<8x128xf32>
    %16 = tpu.matmul %14, %15, %cst_14 {dimension_numbers = #tpu.dot_dimension_numbers<[1], [0], [0], [1], [0, 0, 1, 1], [], []>} : vector<8x128xf32>, vector<128x128xf32>, vector<8x128xf32> -> vector<8x128xf32>
    %c0_15 = arith.constant 0 : index
    %c0_16 = arith.constant 0 : index
    %17 = vector.load %arg7[%c0_15, %c0_16] : memref<1x128xf32, #tpu.memory_space<vmem>>, vector<1x128xf32>
    %18 = vector.broadcast %17 : vector<1x128xf32> to vector<8x128xf32>
    %19 = arith.addf %16, %18 : vector<8x128xf32>
    %cst_17 = arith.constant 0.000000e+00 : f32
    %20 = vector.broadcast %cst_17 : f32 to vector<8x128xf32>
    %21 = arith.maximumf %19, %20 : vector<8x128xf32>
    %c0_18 = arith.constant 0 : index
    %c0_19 = arith.constant 0 : index
    %22 = vector.load %arg8[%c0_18, %c0_19] : memref<128x128xf32, #tpu.memory_space<vmem>>, vector<128x128xf32>
    %cst_20 = arith.constant dense<0.000000e+00> : vector<8x128xf32>
    %23 = tpu.matmul %21, %22, %cst_20 {dimension_numbers = #tpu.dot_dimension_numbers<[1], [0], [0], [1], [0, 0, 1, 1], [], []>} : vector<8x128xf32>, vector<128x128xf32>, vector<8x128xf32> -> vector<8x128xf32>
    %c0_21 = arith.constant 0 : index
    %c0_22 = arith.constant 0 : index
    %24 = vector.load %arg9[%c0_21, %c0_22] : memref<1x128xf32, #tpu.memory_space<vmem>>, vector<1x128xf32>
    %25 = vector.broadcast %24 : vector<1x128xf32> to vector<8x128xf32>
    %26 = arith.addf %23, %25 : vector<8x128xf32>
    %c0_23 = arith.constant 0 : index
    %c0_24 = arith.constant 0 : index
    %27 = vector.load %arg10[%c0_23, %c0_24] : memref<8x128xf32, #tpu.memory_space<vmem>>, vector<8x128xf32>
    tpu.vector_store %arg10[%c0_23, %c0_24], %26 {strides = array<i32>} : memref<8x128xf32, #tpu.memory_space<vmem>>, vector<8x128xf32>,
    return
  }
  func.func @transform_0(%arg0: i32) -> (i32, i32) {
    %c0_i32 = arith.constant 0 : i32
    %c0_i32_0 = arith.constant 0 : i32
    return %arg0, %c0_i32 : i32, i32
  }
  func.func @transform_1(%arg0: i32) -> (i32, i32) {
    %c0_i32 = arith.constant 0 : i32
    %c0_i32_0 = arith.constant 0 : i32
    %c0_i32_1 = arith.constant 0 : i32
    return %c0_i32, %c0_i32_0 : i32, i32
  }
  func.func @transform_2(%arg0: i32) -> (i32, i32) {
    %c0_i32 = arith.constant 0 : i32
    %c0_i32_0 = arith.constant 0 : i32
    %c0_i32_1 = arith.constant 0 : i32
    return %c0_i32, %c0_i32_0 : i32, i32
  }
  func.func @transform_3(%arg0: i32) -> (i32, i32) {
    %c0_i32 = arith.constant 0 : i32
    %c0_i32_0 = arith.constant 0 : i32
    %c0_i32_1 = arith.constant 0 : i32
    return %c0_i32, %c0_i32_0 : i32, i32
  }
  func.func @transform_4(%arg0: i32) -> (i32, i32) {
    %c0_i32 = arith.constant 0 : i32
    %c0_i32_0 = arith.constant 0 : i32
    %c0_i32_1 = arith.constant 0 : i32
    return %c0_i32, %c0_i32_0 : i32, i32
  }
  func.func @transform_5(%arg0: i32) -> (i32, i32) {
    %c0_i32 = arith.constant 0 : i32
    %c0_i32_0 = arith.constant 0 : i32
    %c0_i32_1 = arith.constant 0 : i32
    return %c0_i32, %c0_i32_0 : i32, i32
  }
  func.func @transform_6(%arg0: i32) -> (i32, i32) {
    %c0_i32 = arith.constant 0 : i32
    %c0_i32_0 = arith.constant 0 : i32
    %c0_i32_1 = arith.constant 0 : i32
    return %c0_i32, %c0_i32_0 : i32, i32
  }
  func.func @transform_7(%arg0: i32) -> (i32, i32) {
    %c0_i32 = arith.constant 0 : i32
    %c0_i32_0 = arith.constant 0 : i32
    %c0_i32_1 = arith.constant 0 : i32
    return %c0_i32, %c0_i32_0 : i32, i32
  }
  func.func @transform_8(%arg0: i32) -> (i32, i32) {
    %c0_i32 = arith.constant 0 : i32
    %c0_i32_0 = arith.constant 0 : i32
    %c0_i32_1 = arith.constant 0 : i32
    return %c0_i32, %c0_i32_0 : i32, i32
  }
  func.func @transform_9(%arg0: i32) -> (i32, i32) {
    %c0_i32 = arith.constant 0 : i32
    %c0_i32_0 = arith.constant 0 : i32
    return %arg0, %c0_i32 : i32, i32
  }
}

</mosaic_0001>

<llo_original>
// kernel: tpu_custom_call.1
$region0: #{tpu_custom_call.1}
  #allocation0 [shape = 'u32[]', space=smem, size = 0x4, offset = 0x4, fixed_abs, tag = 'smem constant byte address 0x4 - core index']
  #allocation1 [shape = 'u32[144,128]{1,0:T(1,128)}', space=vmem, size = 0x12000, scoped, tag = 'internal scratch']
  %s0 = inlined_call_operand.hbm [shape: f32[2,64], index: 0, kind: input, shape index: {}]
  %s1 = inlined_call_operand.hbm [shape: f32[64,128], index: 1, kind: input, shape index: {}]
  %s2 = inlined_call_operand.vmem [shape: f32[1,128], index: 2, kind: input, shape index: {}]
  %s3 = inlined_call_operand.hbm [shape: f32[128,128], index: 3, kind: input, shape index: {}]
  %s4 = inlined_call_operand.vmem [shape: f32[1,128], index: 4, kind: input, shape index: {}]
  %s5 = inlined_call_operand.hbm [shape: f32[128,128], index: 5, kind: input, shape index: {}]
  %s6 = inlined_call_operand.vmem [shape: f32[1,128], index: 6, kind: input, shape index: {}]
  %s7 = inlined_call_operand.hbm [shape: f32[128,128], index: 7, kind: input, shape index: {}]
  %s8 = inlined_call_operand.vmem [shape: f32[1,128], index: 8, kind: input, shape index: {}]
  %s9 = inlined_call_operand.hbm [shape: f32[2,128], index: 9, kind: output, shape index: {}]
  %s10 = sld [smem:[#allocation0]]
  $region66: #{tpu_custom_call.1} parent=0
    _
  %s12 = ssub.s32 1, %s10
  %s13 = scalar_select 0, %s12, %s10
  $region1: #{tpu_custom_call.1} parent=0
    #allocation2 [shape = 'u8[4096]{0}', space=vmem, size = 0x1000, scoped, tag = 'input window, operand 0, single buffered']
    #allocation3 [shape = 's32[1]{0}', space=sflag, size = 0x4, scoped, tag = 'scoped memory for tpu_custom_call.1']
    #allocation4 [shape = 's32[1]{0}', space=sflag, size = 0x4, scoped, tag = 'scoped memory for tpu_custom_call.1']
    #allocation5 [shape = 'u8[32768]{0}', space=vmem, size = 0x8000, scoped, tag = 'input window, operand 1, single buffered']
    #allocation6 [shape = 's32[1]{0}', space=sflag, size = 0x4, scoped, tag = 'scoped memory for tpu_custom_call.1']
    #allocation7 [shape = 'u8[65536]{0}', space=vmem, size = 0x10000, scoped, tag = 'input window, operand 3, single buffered']
    #allocation8 [shape = 'u8[65536]{0}', space=vmem, size = 0x10000, scoped, tag = 'input window, operand 5, single buffered']
    #allocation9 [shape = 's32[1]{0}', space=sflag, size = 0x4, scoped, tag = 'scoped memory for tpu_custom_call.1']
    #allocation10 [shape = 'u8[65536]{0}', space=vmem, size = 0x10000, scoped, tag = 'input window, operand 7, single buffered']
    #allocation11 [shape = 'u8[4096]{0}', space=vmem, size = 0x1000, scoped, tag = 'output window, operand 0, single buffered']
    %14 = vsyncpa [#allocation3], 0
    %15 = vsyncpa [#allocation6], 0
    %16 = vsyncpa [#allocation9], 0
    %17 = vsyncpa [#allocation4], 0
    // Predicated region
    $region2: #{tpu_custom_call.1} parent=1 // pred_check
      _
    $region3: #{tpu_custom_call.1} parent=1 // pred_check_branch
      %19 = sbr.rel (0) target = $region5
    $region4: #{tpu_custom_call.1} parent=1 // pred_region
      %s21 = ssub.s32 128, 32
      %22 = vsyncadd [#allocation3], %s21
      %s23 = sshll.u32 [#allocation2], 4
      %s24 = int_to_ptr.vmem [resolvable:$true] %s23
      %29 = dma.hbm_to_vmem [thread:$0]  %s0, 32, %s24, [#allocation3], 32, 32, 2
    $region5: #{tpu_custom_call.1} parent=1 // pred_fallthru
      _
    // Predicated region
    $region6: #{tpu_custom_call.1} parent=1 // pred_check
      _
    $region7: #{tpu_custom_call.1} parent=1 // pred_check_branch
      %31 = sbr.rel (0) target = $region9
    $region8: #{tpu_custom_call.1} parent=1 // pred_region
      %s33 = ssub.s32 1024, 1024
      %34 = vsyncadd [#allocation6], %s33
      %s35 = sshll.u32 [#allocation5], 4
      %s36 = int_to_ptr.vmem [resolvable:$true] %s35
      %41 = dma.hbm_to_vmem [thread:$0]  %s1, 1024, %s36, [#allocation6], 128, 128, 8
    $region9: #{tpu_custom_call.1} parent=1 // pred_fallthru
      _
    // Predicated region
    $region10: #{tpu_custom_call.1} parent=1 // pred_check
      _
    $region11: #{tpu_custom_call.1} parent=1 // pred_check_branch
      %43 = sbr.rel (0) target = $region13
    $region12: #{tpu_custom_call.1} parent=1 // pred_region
      _
    $region13: #{tpu_custom_call.1} parent=1 // pred_fallthru
      _
    // Predicated region
    $region14: #{tpu_custom_call.1} parent=1 // pred_check
      _
    $region15: #{tpu_custom_call.1} parent=1 // pred_check_branch
      %45 = sbr.rel (0) target = $region17
    $region16: #{tpu_custom_call.1} parent=1 // pred_region
      %s47 = ssub.s32 2048, 2048
      %48 = vsyncadd [#allocation6], %s47
      %s49 = sshll.u32 [#allocation7], 4
      %s50 = int_to_ptr.vmem [resolvable:$true] %s49
      %55 = dma.hbm_to_vmem [thread:$0]  %s3, 2048, %s50, [#allocation6], 128, 128, 8
    $region17: #{tpu_custom_call.1} parent=1 // pred_fallthru
      _
    // Predicated region
    $region18: #{tpu_custom_call.1} parent=1 // pred_check
      _
    $region19: #{tpu_custom_call.1} parent=1 // pred_check_branch
      %57 = sbr.rel (0) target = $region21
    $region20: #{tpu_custom_call.1} parent=1 // pred_region
      _
    $region21: #{tpu_custom_call.1} parent=1 // pred_fallthru
      _
    // Predicated region
    $region22: #{tpu_custom_call.1} parent=1 // pred_check
      _
    $region23: #{tpu_custom_call.1} parent=1 // pred_check_branch
      %59 = sbr.rel (0) target = $region25
    $region24: #{tpu_custom_call.1} parent=1 // pred_region
      %s61 = ssub.s32 2048, 2048
      %62 = vsyncadd [#allocation9], %s61
      %s63 = sshll.u32 [#allocation8], 4
      %s64 = int_to_ptr.vmem [resolvable:$true] %s63
      %69 = dma.hbm_to_vmem [thread:$0]  %s5, 2048, %s64, [#allocation9], 128, 128, 8
    $region25: #{tpu_custom_call.1} parent=1 // pred_fallthru
      _
    // Predicated region
    $region26: #{tpu_custom_call.1} parent=1 // pred_check
      _
    $region27: #{tpu_custom_call.1} parent=1 // pred_check_branch
      %71 = sbr.rel (0) target = $region29
    $region28: #{tpu_custom_call.1} parent=1 // pred_region
      _
    $region29: #{tpu_custom_call.1} parent=1 // pred_fallthru
      _
    // Predicated region
    $region30: #{tpu_custom_call.1} parent=1 // pred_check
      _
    $region31: #{tpu_custom_call.1} parent=1 // pred_check_branch
      %73 = sbr.rel (0) target = $region33
    $region32: #{tpu_custom_call.1} parent=1 // pred_region
      %s75 = ssub.s32 2048, 2048
      %76 = vsyncadd [#allocation9], %s75
      %s77 = sshll.u32 [#allocation10], 4
      %s78 = int_to_ptr.vmem [resolvable:$true] %s77
      %83 = dma.hbm_to_vmem [thread:$0]  %s7, 2048, %s78, [#allocation9], 128, 128, 8
    $region33: #{tpu_custom_call.1} parent=1 // pred_fallthru
      _
    // Predicated region
    $region34: #{tpu_custom_call.1} parent=1 // pred_check
      _
    $region35: #{tpu_custom_call.1} parent=1 // pred_check_branch
      %85 = sbr.rel (0) target = $region37
    $region36: #{tpu_custom_call.1} parent=1 // pred_region
      _
    $region37: #{tpu_custom_call.1} parent=1 // pred_fallthru
      _
    // Predicated region
    $region38: #{tpu_custom_call.1} parent=1 // pred_check
      _
    $region39: #{tpu_custom_call.1} parent=1 // pred_check_branch
      %87 = sbr.rel (0) target = $region41
    $region40: #{tpu_custom_call.1} parent=1 // pred_region
      %88 = dma.done [#allocation3], 128
    $region41: #{tpu_custom_call.1} parent=1 // pred_fallthru
      _
    // Predicated region
    $region42: #{tpu_custom_call.1} parent=1 // pred_check
      _
    $region43: #{tpu_custom_call.1} parent=1 // pred_check_branch
      %90 = sbr.rel (0) target = $region45
    $region44: #{tpu_custom_call.1} parent=1 // pred_region
      %91 = dma.done [#allocation6], 1024
    $region45: #{tpu_custom_call.1} parent=1 // pred_fallthru
      _
    // Predicated region
    $region46: #{tpu_custom_call.1} parent=1 // pred_check
      _
    $region47: #{tpu_custom_call.1} parent=1 // pred_check_branch
      %93 = sbr.rel (0) target = $region49
    $region48: #{tpu_custom_call.1} parent=1 // pred_region
      %94 = dma.done [#allocation6], 2048
    $region49: #{tpu_custom_call.1} parent=1 // pred_fallthru
      _
    // Predicated region
    $region50: #{tpu_custom_call.1} parent=1 // pred_check
      _
    $region51: #{tpu_custom_call.1} parent=1 // pred_check_branch
      %96 = sbr.rel (0) target = $region53
    $region52: #{tpu_custom_call.1} parent=1 // pred_region
      %97 = dma.done [#allocation9], 2048
    $region53: #{tpu_custom_call.1} parent=1 // pred_fallthru
      _
    // Predicated region
    $region54: #{tpu_custom_call.1} parent=1 // pred_check
      _
    $region55: #{tpu_custom_call.1} parent=1 // pred_check_branch
      %99 = sbr.rel (0) target = $region57
    $region56: #{tpu_custom_call.1} parent=1 // pred_region
      %100 = dma.done [#allocation9], 2048
    $region57: #{tpu_custom_call.1} parent=1 // pred_fallthru
      _
    %v101 = vld [vmem:[#allocation2] sm:$0xff]
    %v102 = vld [vmem:[#allocation5] sm:$0xff]
    %v103 = vld [vmem:[#allocation5 + $0x8] sm:$0xff]
    %v104 = vld [vmem:[#allocation5 + $0x10] sm:$0xff]
    %v105 = vld [vmem:[#allocation5 + $0x18] sm:$0xff]
    %v106 = vld [vmem:[#allocation5 + $0x20] sm:$0xff]
    %v107 = vld [vmem:[#allocation5 + $0x28] sm:$0xff]
    %v108 = vld [vmem:[#allocation5 + $0x30] sm:$0xff]
    %v109 = vld [vmem:[#allocation5 + $0x38] sm:$0xff]
    %v110 = vld [vmem:[%s2] sm:$0x1]
    %v112 = vlaneseq
    %v113 = vshrl.u32 %v112, 7
    %v114 = vsub.s32 0, %v113
    %v115 = vrot.slane %v110, %v114
    %vm117 = vcmask 523264
    %v119 = vsel %vm117, %v101, 0
    %121 = vmatprep.subr.mxu0 0.0
    %122 = vmatpush1.msra.mxu0 %v102
    %123 = vmatprep.subr.mxu0 0.0
    %124 = vmatpush1.msra.mxu0 %v103
    %125 = vmatprep.subr.mxu0 0.0
    %126 = vmatpush1.msra.mxu0 %v104
    %127 = vmatprep.subr.mxu0 0.0
    %128 = vmatpush1.msra.mxu0 %v105
    %129 = vmatprep.subr.mxu0 0.0
    %130 = vmatpush1.msra.mxu0 %v106
    %131 = vmatprep.subr.mxu0 0.0
    %132 = vmatpush1.msra.mxu0 %v107
    %133 = vmatprep.subr.mxu0 0.0
    %134 = vmatpush1.msra.mxu0 %v108
    %135 = vmatprep.subr.mxu0 0.0
    %136 = vmatpush1.msra.mxu0 %v109
    %137 = vmatprep.subr.mxu0 0.0
    %138 = vmatpush1.msra.mxu0 0.0
    %139 = vmatprep.subr.mxu0 0.0
    %140 = vmatpush1.msra.mxu0 0.0
    %141 = vmatprep.subr.mxu0 0.0
    %142 = vmatpush1.msra.mxu0 0.0
    %143 = vmatprep.subr.mxu0 0.0
    %144 = vmatpush1.msra.mxu0 0.0
    %145 = vmatprep.subr.mxu0 0.0
    %146 = vmatpush1.msra.mxu0 0.0
    %147 = vmatprep.subr.mxu0 0.0
    %148 = vmatpush1.msra.mxu0 0.0
    %149 = vmatprep.subr.mxu0 0.0
    %150 = vmatpush1.msra.mxu0 0.0
    %151 = vmatprep.subr.mxu0 0.0
    %152 = vmatpush1.msra.mxu0 0.0
    %153 = vmatprep.subr.mxu0 0.0
    %154 = vmatpush1.msra.mxu0 0.0
    %155 = vmatprep.subr.mxu0 0.0
    %156 = vmatpush1.msra.mxu0 0.0
    %157 = vmatprep.subr.mxu0 0.0
    %158 = vmatpush1.msra.mxu0 0.0
    %159 = vmatprep.subr.mxu0 0.0
    %160 = vmatpush1.msra.mxu0 0.0
    %161 = vmatprep.subr.mxu0 0.0
    %162 = vmatpush1.msra.mxu0 0.0
    %163 = vmatprep.subr.mxu0 0.0
    %164 = vmatpush1.msra.mxu0 0.0
    %165 = vmatprep.subr.mxu0 0.0
    %166 = vmatpush1.msra.mxu0 0.0
    %167 = vmatprep.subr.mxu0 0.0
    %168 = vmatpush1.msra.mxu0 0.0
    %169 = vmatprep.subr.mxu0 0.0
    %170 = vmatpush1.msra.mxu0 0.0
    %171 = vmatprep.subr.mxu0 0.0
    %172 = vmatpush1.msra.mxu0 0.0
    %173 = vmatprep.subr.mxu0 0.0
    %174 = vmatpush1.msra.mxu0 0.0
    %175 = vmatprep.subr.mxu0 0.0
    %176 = vmatpush1.msra.mxu0 0.0
    %177 = vmatprep.subr.mxu0 0.0
    %178 = vmatpush1.msra.mxu0 0.0
    %179 = vmatprep.subr.mxu0 0.0
    %180 = vmatpush1.msra.mxu0 0.0
    %181 = vmatprep.subr.mxu0 0.0
    %182 = vmatpush1.msra.mxu0 0.0
    %183 = vmatprep.subr.mxu0 0.0
    %184 = vmatpush1.msra.mxu0 0.0
    %185 = vmatprep.mubr.f32.mxu0 0.0
    %186 = vmatmul.mubr.f32.gmra.mrb[0].mxu0 %v119
    %v187 = vpop.f32.mrb[0].mxu0
    %v188 = vadd.f32 %v115, %v187
    %v189 = vpop.f32.mrb[0].mxu0
    %190 = vdwg.mxu0
    %v191 = vmax.f32 %v188, 0.0
    %v192 = vld [vmem:[#allocation7] sm:$0xff]
    %v193 = vld [vmem:[#allocation7 + $0x8] sm:$0xff]
    %v194 = vld [vmem:[#allocation7 + $0x10] sm:$0xff]
    %v195 = vld [vmem:[#allocation7 + $0x18] sm:$0xff]
    %v196 = vld [vmem:[#allocation7 + $0x20] sm:$0xff]
    %v197 = vld [vmem:[#allocation7 + $0x28] sm:$0xff]
    %v198 = vld [vmem:[#allocation7 + $0x30] sm:$0xff]
    %v199 = vld [vmem:[#allocation7 + $0x38] sm:$0xff]
    %v200 = vld [vmem:[#allocation7 + $0x40] sm:$0xff]
    %v201 = vld [vmem:[#allocation7 + $0x48] sm:$0xff]
    %v202 = vld [vmem:[#allocation7 + $0x50] sm:$0xff]
    %v203 = vld [vmem:[#allocation7 + $0x58] sm:$0xff]
    %v204 = vld [vmem:[#allocation7 + $0x60] sm:$0xff]
    %v205 = vld [vmem:[#allocation7 + $0x68] sm:$0xff]
    %v206 = vld [vmem:[#allocation7 + $0x70] sm:$0xff]
    %v207 = vld [vmem:[#allocation7 + $0x78] sm:$0xff]
    %v208 = vld [vmem:[%s4] sm:$0x1]
    %v210 = vlaneseq
    %v211 = vshrl.u32 %v210, 7
    %v212 = vsub.s32 0, %v211
    %v213 = vrot.slane %v208, %v212
    %215 = vmatprep.subr.mxu0 0.0
    %216 = vmatpush1.msra.mxu0 %v192
    %217 = vmatprep.subr.mxu0 0.0
    %218 = vmatpush1.msra.mxu0 %v193
    %219 = vmatprep.subr.mxu0 0.0
    %220 = vmatpush1.msra.mxu0 %v194
    %221 = vmatprep.subr.mxu0 0.0
    %222 = vmatpush1.msra.mxu0 %v195
    %223 = vmatprep.subr.mxu0 0.0
    %224 = vmatpush1.msra.mxu0 %v196
    %225 = vmatprep.subr.mxu0 0.0
    %226 = vmatpush1.msra.mxu0 %v197
    %227 = vmatprep.subr.mxu0 0.0
    %228 = vmatpush1.msra.mxu0 %v198
    %229 = vmatprep.subr.mxu0 0.0
    %230 = vmatpush1.msra.mxu0 %v199
    %231 = vmatprep.subr.mxu0 0.0
    %232 = vmatpush1.msra.mxu0 %v200
    %233 = vmatprep.subr.mxu0 0.0
    %234 = vmatpush1.msra.mxu0 %v201
    %235 = vmatprep.subr.mxu0 0.0
    %236 = vmatpush1.msra.mxu0 %v202
    %237 = vmatprep.subr.mxu0 0.0
    %238 = vmatpush1.msra.mxu0 %v203
    %239 = vmatprep.subr.mxu0 0.0
    %240 = vmatpush1.msra.mxu0 %v204
    %241 = vmatprep.subr.mxu0 0.0
    %242 = vmatpush1.msra.mxu0 %v205
    %243 = vmatprep.subr.mxu0 0.0
    %244 = vmatpush1.msra.mxu0 %v206
    %245 = vmatprep.subr.mxu0 0.0
    %246 = vmatpush1.msra.mxu0 %v207
    %247 = vmatprep.subr.mxu0 0.0
    %248 = vmatpush1.msra.mxu0 0.0
    %249 = vmatprep.subr.mxu0 0.0
    %250 = vmatpush1.msra.mxu0 0.0
    %251 = vmatprep.subr.mxu0 0.0
    %252 = vmatpush1.msra.mxu0 0.0
    %253 = vmatprep.subr.mxu0 0.0
    %254 = vmatpush1.msra.mxu0 0.0
    %255 = vmatprep.subr.mxu0 0.0
    %256 = vmatpush1.msra.mxu0 0.0
    %257 = vmatprep.subr.mxu0 0.0
    %258 = vmatpush1.msra.mxu0 0.0
    %259 = vmatprep.subr.mxu0 0.0
    %260 = vmatpush1.msra.mxu0 0.0
    %261 = vmatprep.subr.mxu0 0.0
    %262 = vmatpush1.msra.mxu0 0.0
    %263 = vmatprep.subr.mxu0 0.0
    %264 = vmatpush1.msra.mxu0 0.0
    %265 = vmatprep.subr.mxu0 0.0
    %266 = vmatpush1.msra.mxu0 0.0
    %267 = vmatprep.subr.mxu0 0.0
    %268 = vmatpush1.msra.mxu0 0.0
    %269 = vmatprep.subr.mxu0 0.0
    %270 = vmatpush1.msra.mxu0 0.0
    %271 = vmatprep.subr.mxu0 0.0
    %272 = vmatpush1.msra.mxu0 0.0
    %273 = vmatprep.subr.mxu0 0.0
    %274 = vmatpush1.msra.mxu0 0.0
    %275 = vmatprep.subr.mxu0 0.0
    %276 = vmatpush1.msra.mxu0 0.0
    %277 = vmatprep.subr.mxu0 0.0
    %278 = vmatpush1.msra.mxu0 0.0
    %279 = vmatprep.mubr.f32.mxu0 0.0
    %280 = vmatmul.mubr.f32.gmra.mrb[0].mxu0 %v191
    %v281 = vpop.f32.mrb[0].mxu0
    %v282 = vadd.f32 %v213, %v281
    %v283 = vpop.f32.mrb[0].mxu0
    %284 = vdwg.mxu0
    %v285 = vmax.f32 %v282, 0.0
    %v286 = vld [vmem:[#allocation8] sm:$0xff]
    %v287 = vld [vmem:[#allocation8 + $0x8] sm:$0xff]
    %v288 = vld [vmem:[#allocation8 + $0x10] sm:$0xff]
    %v289 = vld [vmem:[#allocation8 + $0x18] sm:$0xff]
    %v290 = vld [vmem:[#allocation8 + $0x20] sm:$0xff]
    %v291 = vld [vmem:[#allocation8 + $0x28] sm:$0xff]
    %v292 = vld [vmem:[#allocation8 + $0x30] sm:$0xff]
    %v293 = vld [vmem:[#allocation8 + $0x38] sm:$0xff]
    %v294 = vld [vmem:[#allocation8 + $0x40] sm:$0xff]
    %v295 = vld [vmem:[#allocation8 + $0x48] sm:$0xff]
    %v296 = vld [vmem:[#allocation8 + $0x50] sm:$0xff]
    %v297 = vld [vmem:[#allocation8 + $0x58] sm:$0xff]
    %v298 = vld [vmem:[#allocation8 + $0x60] sm:$0xff]
    %v299 = vld [vmem:[#allocation8 + $0x68] sm:$0xff]
    %v300 = vld [vmem:[#allocation8 + $0x70] sm:$0xff]
    %v301 = vld [vmem:[#allocation8 + $0x78] sm:$0xff]
    %v302 = vld [vmem:[%s6] sm:$0x1]
    %v304 = vlaneseq
    %v305 = vshrl.u32 %v304, 7
    %v306 = vsub.s32 0, %v305
    %v307 = vrot.slane %v302, %v306
    %309 = vmatprep.subr.mxu0 0.0
    %310 = vmatpush1.msra.mxu0 %v286
    %311 = vmatprep.subr.mxu0 0.0
    %312 = vmatpush1.msra.mxu0 %v287
    %313 = vmatprep.subr.mxu0 0.0
    %314 = vmatpush1.msra.mxu0 %v288
    %315 = vmatprep.subr.mxu0 0.0
    %316 = vmatpush1.msra.mxu0 %v289
    %317 = vmatprep.subr.mxu0 0.0
    %318 = vmatpush1.msra.mxu0 %v290
    %319 = vmatprep.subr.mxu0 0.0
    %320 = vmatpush1.msra.mxu0 %v291
    %321 = vmatprep.subr.mxu0 0.0
    %322 = vmatpush1.msra.mxu0 %v292
    %323 = vmatprep.subr.mxu0 0.0
    %324 = vmatpush1.msra.mxu0 %v293
    %325 = vmatprep.subr.mxu0 0.0
    %326 = vmatpush1.msra.mxu0 %v294
    %327 = vmatprep.subr.mxu0 0.0
    %328 = vmatpush1.msra.mxu0 %v295
    %329 = vmatprep.subr.mxu0 0.0
    %330 = vmatpush1.msra.mxu0 %v296
    %331 = vmatprep.subr.mxu0 0.0
    %332 = vmatpush1.msra.mxu0 %v297
    %333 = vmatprep.subr.mxu0 0.0
    %334 = vmatpush1.msra.mxu0 %v298
    %335 = vmatprep.subr.mxu0 0.0
    %336 = vmatpush1.msra.mxu0 %v299
    %337 = vmatprep.subr.mxu0 0.0
    %338 = vmatpush1.msra.mxu0 %v300
    %339 = vmatprep.subr.mxu0 0.0
    %340 = vmatpush1.msra.mxu0 %v301
    %341 = vmatprep.subr.mxu0 0.0
    %342 = vmatpush1.msra.mxu0 0.0
    %343 = vmatprep.subr.mxu0 0.0
    %344 = vmatpush1.msra.mxu0 0.0
    %345 = vmatprep.subr.mxu0 0.0
    %346 = vmatpush1.msra.mxu0 0.0
    %347 = vmatprep.subr.mxu0 0.0
    %348 = vmatpush1.msra.mxu0 0.0
    %349 = vmatprep.subr.mxu0 0.0
    %350 = vmatpush1.msra.mxu0 0.0
    %351 = vmatprep.subr.mxu0 0.0
    %352 = vmatpush1.msra.mxu0 0.0
    %353 = vmatprep.subr.mxu0 0.0
    %354 = vmatpush1.msra.mxu0 0.0
    %355 = vmatprep.subr.mxu0 0.0
    %356 = vmatpush1.msra.mxu0 0.0
    %357 = vmatprep.subr.mxu0 0.0
    %358 = vmatpush1.msra.mxu0 0.0
    %359 = vmatprep.subr.mxu0 0.0
    %360 = vmatpush1.msra.mxu0 0.0
    %361 = vmatprep.subr.mxu0 0.0
    %362 = vmatpush1.msra.mxu0 0.0
    %363 = vmatprep.subr.mxu0 0.0
    %364 = vmatpush1.msra.mxu0 0.0
    %365 = vmatprep.subr.mxu0 0.0
    %366 = vmatpush1.msra.mxu0 0.0
    %367 = vmatprep.subr.mxu0 0.0
    %368 = vmatpush1.msra.mxu0 0.0
    %369 = vmatprep.subr.mxu0 0.0
    %370 = vmatpush1.msra.mxu0 0.0
    %371 = vmatprep.subr.mxu0 0.0
    %372 = vmatpush1.msra.mxu0 0.0
    %373 = vmatprep.mubr.f32.mxu0 0.0
    %374 = vmatmul.mubr.f32.gmra.mrb[0].mxu0 %v285
    %v375 = vpop.f32.mrb[0].mxu0
    %v376 = vadd.f32 %v307, %v375
    %v377 = vpop.f32.mrb[0].mxu0
    %378 = vdwg.mxu0
    %v379 = vmax.f32 %v376, 0.0
    %v380 = vld [vmem:[#allocation10] sm:$0xff]
    %v381 = vld [vmem:[#allocation10 + $0x8] sm:$0xff]
    %v382 = vld [vmem:[#allocation10 + $0x10] sm:$0xff]
    %v383 = vld [vmem:[#allocation10 + $0x18] sm:$0xff]
    %v384 = vld [vmem:[#allocation10 + $0x20] sm:$0xff]
    %v385 = vld [vmem:[#allocation10 + $0x28] sm:$0xff]
    %v386 = vld [vmem:[#allocation10 + $0x30] sm:$0xff]
    %v387 = vld [vmem:[#allocation10 + $0x38] sm:$0xff]
    %v388 = vld [vmem:[#allocation10 + $0x40] sm:$0xff]
    %v389 = vld [vmem:[#allocation10 + $0x48] sm:$0xff]
    %v390 = vld [vmem:[#allocation10 + $0x50] sm:$0xff]
    %v391 = vld [vmem:[#allocation10 + $0x58] sm:$0xff]
    %v392 = vld [vmem:[#allocation10 + $0x60] sm:$0xff]
    %v393 = vld [vmem:[#allocation10 + $0x68] sm:$0xff]
    %v394 = vld [vmem:[#allocation10 + $0x70] sm:$0xff]
    %v395 = vld [vmem:[#allocation10 + $0x78] sm:$0xff]
    %v396 = vld [vmem:[%s8] sm:$0x1]
    %v398 = vlaneseq
    %v399 = vshrl.u32 %v398, 7
    %v400 = vsub.s32 0, %v399
    %v401 = vrot.slane %v396, %v400
    %403 = vmatprep.subr.mxu0 0.0
    %404 = vmatpush1.msra.mxu0 %v380
    %405 = vmatprep.subr.mxu0 0.0
    %406 = vmatpush1.msra.mxu0 %v381
    %407 = vmatprep.subr.mxu0 0.0
    %408 = vmatpush1.msra.mxu0 %v382
    %409 = vmatprep.subr.mxu0 0.0
    %410 = vmatpush1.msra.mxu0 %v383
    %411 = vmatprep.subr.mxu0 0.0
    %412 = vmatpush1.msra.mxu0 %v384
    %413 = vmatprep.subr.mxu0 0.0
    %414 = vmatpush1.msra.mxu0 %v385
    %415 = vmatprep.subr.mxu0 0.0
    %416 = vmatpush1.msra.mxu0 %v386
    %417 = vmatprep.subr.mxu0 0.0
    %418 = vmatpush1.msra.mxu0 %v387
    %419 = vmatprep.subr.mxu0 0.0
    %420 = vmatpush1.msra.mxu0 %v388
    %421 = vmatprep.subr.mxu0 0.0
    %422 = vmatpush1.msra.mxu0 %v389
    %423 = vmatprep.subr.mxu0 0.0
    %424 = vmatpush1.msra.mxu0 %v390
    %425 = vmatprep.subr.mxu0 0.0
    %426 = vmatpush1.msra.mxu0 %v391
    %427 = vmatprep.subr.mxu0 0.0
    %428 = vmatpush1.msra.mxu0 %v392
    %429 = vmatprep.subr.mxu0 0.0
    %430 = vmatpush1.msra.mxu0 %v393
    %431 = vmatprep.subr.mxu0 0.0
    %432 = vmatpush1.msra.mxu0 %v394
    %433 = vmatprep.subr.mxu0 0.0
    %434 = vmatpush1.msra.mxu0 %v395
    %435 = vmatprep.subr.mxu0 0.0
    %436 = vmatpush1.msra.mxu0 0.0
    %437 = vmatprep.subr.mxu0 0.0
    %438 = vmatpush1.msra.mxu0 0.0
    %439 = vmatprep.subr.mxu0 0.0
    %440 = vmatpush1.msra.mxu0 0.0
    %441 = vmatprep.subr.mxu0 0.0
    %442 = vmatpush1.msra.mxu0 0.0
    %443 = vmatprep.subr.mxu0 0.0
    %444 = vmatpush1.msra.mxu0 0.0
    %445 = vmatprep.subr.mxu0 0.0
    %446 = vmatpush1.msra.mxu0 0.0
    %447 = vmatprep.subr.mxu0 0.0
    %448 = vmatpush1.msra.mxu0 0.0
    %449 = vmatprep.subr.mxu0 0.0
    %450 = vmatpush1.msra.mxu0 0.0
    %451 = vmatprep.subr.mxu0 0.0
    %452 = vmatpush1.msra.mxu0 0.0
    %453 = vmatprep.subr.mxu0 0.0
    %454 = vmatpush1.msra.mxu0 0.0
    %455 = vmatprep.subr.mxu0 0.0
    %456 = vmatpush1.msra.mxu0 0.0
    %457 = vmatprep.subr.mxu0 0.0
    %458 = vmatpush1.msra.mxu0 0.0
    %459 = vmatprep.subr.mxu0 0.0
    %460 = vmatpush1.msra.mxu0 0.0
    %461 = vmatprep.subr.mxu0 0.0
    %462 = vmatpush1.msra.mxu0 0.0
    %463 = vmatprep.subr.mxu0 0.0
    %464 = vmatpush1.msra.mxu0 0.0
    %465 = vmatprep.subr.mxu0 0.0
    %466 = vmatpush1.msra.mxu0 0.0
    %467 = vmatprep.mubr.f32.mxu0 0.0
    %468 = vmatmul.mubr.f32.gmra.mrb[0].mxu0 %v379
    %v469 = vpop.f32.mrb[0].mxu0
    %v470 = vadd.f32 %v401, %v469
    %v471 = vpop.f32.mrb[0].mxu0
    %472 = vdwg.mxu0
    %473 = vst [vmem:[#allocation11] sm:$0xff] %v470
    // Predicated region
    $region58: #{tpu_custom_call.1} parent=1 // pred_check
      _
    $region59: #{tpu_custom_call.1} parent=1 // pred_check_branch
      %475 = sbr.rel (0) target = $region61
    $region60: #{tpu_custom_call.1} parent=1 // pred_region
      %s477 = ssub.s32 128, 32
      %478 = vsyncadd [#allocation4], %s477
      %s479 = sshll.u32 [#allocation11], 4
      %s480 = int_to_ptr.vmem [resolvable:$true] %s479
      %485 = dma.vmem_to_hbm [thread:$0]  %s480, 32, %s9, [#allocation4], 32, 32, 2
    $region61: #{tpu_custom_call.1} parent=1 // pred_fallthru
      _
    // Predicated region
    $region62: #{tpu_custom_call.1} parent=1 // pred_check
      _
    $region63: #{tpu_custom_call.1} parent=1 // pred_check_branch
      %487 = sbr.rel (0) target = $region65
    $region64: #{tpu_custom_call.1} parent=1 // pred_region
      %488 = dma.done [#allocation4], 128
    $region65: #{tpu_custom_call.1} parent=1 // pred_fallthru
      _
    %489 = vsyncpa [#allocation3], 1
    %490 = vsyncpa [#allocation6], 1
    %491 = vsyncpa [#allocation9], 1
    %492 = vsyncpa [#allocation4], 1

</llo_original>
